<compile_context>
chip_gen: v5e
topology: v5e:2x2
jax: 0.10.0
libtpu: 0.0.40
codegen_flags: <defaults>
</compile_context>

<pallas_src>
import functools
import numpy as np
import jax
import jax.numpy as jnp
from jax.experimental import pallas as pl
from jax.experimental.pallas import tpu as pltpu


# ------------------------------- helpers ------------------------------------

def _round_up(x, m):
    return ((x + m - 1) // m) * m


def _pad_to(x, shape):
    pads = [(0, t - s) for s, t in zip(x.shape, shape)]
    if all(p == (0, 0) for p in pads):
        return x
    return jnp.pad(x, pads)


# --------------------- tiled linear with fused epilogue ----------------------

def _linear_kernel(x_ref, w_ref, b_ref, o_ref, acc_ref, *, activation):
    k = pl.program_id(2)

    @pl.when(k == 0)
    def _():
        acc_ref[...] = jnp.zeros_like(acc_ref)

    acc_ref[...] += jnp.dot(x_ref[...], w_ref[...],
                            preferred_element_type=jnp.float32)

    @pl.when(k == pl.num_programs(2) - 1)
    def _():
        y = acc_ref[...] + b_ref[...]
        if activation == "relu":
            y = jnp.maximum(y, 0.0)
        elif activation == "gelu":
            # tanh-approximate GELU (EUP-friendly; backbone is synthetic).
            y3 = y * y * y
            y = 0.5 * y * (1.0 + jnp.tanh(0.7978845608028654
                                          * (y + 0.044715 * y3)))
        o_ref[...] = y


def pallas_linear(x, w, b, activation=None):
    """y = act(x @ w + b).  x:(M,K), w:(K,N), b:(N,) -> (M,N) f32.

    bf16 MXU operands, f32 accumulation in VMEM scratch, fused epilogue."""
    M, K = x.shape
    N = w.shape[1]
    tm = min(256, _round_up(M, 16))
    tk = min(512, _round_up(K, 128))
    tn = min(256, _round_up(N, 128))
    Mp, Kp, Np = _round_up(M, tm), _round_up(K, tk), _round_up(N, tn)
    xp = _pad_to(x.astype(jnp.bfloat16), (Mp, Kp))
    wp = _pad_to(w.astype(jnp.bfloat16), (Kp, Np))
    bp = _pad_to(b.reshape(1, N).astype(jnp.float32), (1, Np))
    kern = functools.partial(_linear_kernel, activation=activation)
    out = pl.pallas_call(
        kern,
        out_shape=jax.ShapeDtypeStruct((Mp, Np), jnp.float32),
        grid=(Mp // tm, Np // tn, Kp // tk),
        in_specs=[pl.BlockSpec((tm, tk), lambda i, j, k: (i, k)),
                  pl.BlockSpec((tk, tn), lambda i, j, k: (k, j)),
                  pl.BlockSpec((1, tn), lambda i, j, k: (0, j))],
        out_specs=pl.BlockSpec((tm, tn), lambda i, j, k: (i, j)),
        scratch_shapes=[pltpu.VMEM((tm, tn), jnp.float32)],
        compiler_params=pltpu.CompilerParams(
            dimension_semantics=("parallel", "parallel", "arbitrary")),
    )(xp, wp, bp)
    return out[:M, :N]


# -------------- fused 2-layer FFNN (linear + ReLU + linear -> 1) -------------

def _ffnn_scalar_kernel(x_ref, w1_ref, b1_ref, w2_ref, b2_ref, o_ref, acc_ref):
    k = pl.program_id(1)

    @pl.when(k == 0)
    def _():
        acc_ref[...] = jnp.zeros_like(acc_ref)

    acc_ref[...] += jnp.dot(x_ref[...], w1_ref[...],
                            preferred_element_type=jnp.float32)

    @pl.when(k == pl.num_programs(1) - 1)
    def _():
        hdn = jnp.maximum(acc_ref[...] + b1_ref[...], 0.0)
        # second Linear has out_features == 1 -> do it as an in-kernel
        # reduction (hidden activation never hits HBM).
        o_ref[...] = (jnp.sum(hdn * w2_ref[...], axis=-1, keepdims=True)
                      + b2_ref[...])


def pallas_ffnn_scalar(x, w1, b1, w2, b2):
    """relu(x @ w1 + b1) @ w2 + b2 with w2:(F,1).  Returns (R,) f32."""
    R, K = x.shape
    F = w1.shape[1]
    tr = min(256, _round_up(R, 16))
    tk = min(512, _round_up(K, 128))
    Rp, Kp = _round_up(R, tr), _round_up(K, tk)
    xp = _pad_to(x.astype(jnp.bfloat16), (Rp, Kp))
    w1p = _pad_to(w1.astype(jnp.bfloat16), (Kp, F))
    b1p = b1.reshape(1, F).astype(jnp.float32)
    w2p = w2.reshape(1, F).astype(jnp.float32)
    b2p = b2.reshape(1, 1).astype(jnp.float32)
    out = pl.pallas_call(
        _ffnn_scalar_kernel,
        out_shape=jax.ShapeDtypeStruct((Rp, 1), jnp.float32),
        grid=(Rp // tr, Kp // tk),
        in_specs=[pl.BlockSpec((tr, tk), lambda i, k: (i, k)),
                  pl.BlockSpec((tk, F), lambda i, k: (k, 0)),
                  pl.BlockSpec((1, F), lambda i, k: (0, 0)),
                  pl.BlockSpec((1, F), lambda i, k: (0, 0)),
                  pl.BlockSpec((1, 1), lambda i, k: (0, 0))],
        out_specs=pl.BlockSpec((tr, 1), lambda i, k: (i, 0)),
        scratch_shapes=[pltpu.VMEM((tr, F), jnp.float32)],
        compiler_params=pltpu.CompilerParams(
            dimension_semantics=("parallel", "arbitrary")),
    )(xp, w1p, b1p, w2p, b2p)
    return out[:R, 0]


# -------------------------- LayerNorm (+ residual) ---------------------------

def _ln_kernel(x_ref, g_ref, b_ref, o_ref):
    x = x_ref[...]
    mu = jnp.mean(x, axis=-1, keepdims=True)
    var = jnp.mean(jnp.square(x - mu), axis=-1, keepdims=True)
    o_ref[...] = (x - mu) * jax.lax.rsqrt(var + 1e-12) * g_ref[...] + b_ref[...]


def _ln_res_kernel(x_ref, r_ref, g_ref, b_ref, o_ref):
    x = x_ref[...] + r_ref[...]          # residual add fused in
    mu = jnp.mean(x, axis=-1, keepdims=True)
    var = jnp.mean(jnp.square(x - mu), axis=-1, keepdims=True)
    o_ref[...] = (x - mu) * jax.lax.rsqrt(var + 1e-12) * g_ref[...] + b_ref[...]


def pallas_layernorm(x, g, b, residual=None):
    R, H = x.shape
    tr = min(512, _round_up(R, 8))
    Rp = _round_up(R, tr)
    gp = g.reshape(1, H).astype(jnp.float32)
    bp = b.reshape(1, H).astype(jnp.float32)
    xp = _pad_to(x.astype(jnp.float32), (Rp, H))
    row_spec = pl.BlockSpec((tr, H), lambda i: (i, 0))
    vec_spec = pl.BlockSpec((1, H), lambda i: (0, 0))
    cparams = pltpu.CompilerParams(dimension_semantics=("parallel",))
    if residual is None:
        out = pl.pallas_call(
            _ln_kernel,
            out_shape=jax.ShapeDtypeStruct((Rp, H), jnp.float32),
            grid=(Rp // tr,),
            in_specs=[row_spec, vec_spec, vec_spec],
            out_specs=row_spec,
            compiler_params=cparams,
        )(xp, gp, bp)
    else:
        rp = _pad_to(residual.astype(jnp.float32), (Rp, H))
        out = pl.pallas_call(
            _ln_res_kernel,
            out_shape=jax.ShapeDtypeStruct((Rp, H), jnp.float32),
            grid=(Rp // tr,),
            in_specs=[row_spec, row_spec, vec_spec, vec_spec],
            out_specs=row_spec,
            compiler_params=cparams,
        )(xp, rp, gp, bp)
    return out[:R]


# ----------------------- multi-head self-attention core ----------------------

def _mha_kernel(q_ref, k_ref, v_ref, bias_ref, o_ref, *, scale):
    q = q_ref[0]                         # (nh, L, dh) bf16
    k = k_ref[0]
    v = v_ref[0]
    bias = bias_ref[0]                   # (1, L) f32 additive mask
    # batched qk^T without materializing a transpose
    s = jax.lax.dot_general(q, k, (((2,), (2,)), ((0,), (0,))),
                            preferred_element_type=jnp.float32)
    s = s * scale + bias[:, None, :]
    s = s - jnp.max(s, axis=-1, keepdims=True)
    p = jnp.exp(s)
    p = p * pl.reciprocal(jnp.sum(p, axis=-1, keepdims=True), approx=True)
    o_ref[0] = jax.lax.dot_general(p.astype(v.dtype), v,
                                   (((2,), (1,)), ((0,), (0,))),
                                   preferred_element_type=jnp.float32)


def pallas_mha(q, k, v, bias, scale):
    """q,k,v: (B, nh, L, dh) bf16; bias: (B, 1, L) f32.  All heads of one
    batch element are processed per grid step (batched MXU dots)."""
    B, nh, L, dh = q.shape
    kern = functools.partial(_mha_kernel, scale=scale)
    qkv_spec = pl.BlockSpec((1, nh, L, dh), lambda i: (i, 0, 0, 0))
    return pl.pallas_call(
        kern,
        out_shape=jax.ShapeDtypeStruct((B, nh, L, dh), jnp.float32),
        grid=(B,),
        in_specs=[qkv_spec, qkv_spec, qkv_spec,
                  pl.BlockSpec((1, 1, L), lambda i: (i, 0, 0))],
        out_specs=qkv_spec,
        compiler_params=pltpu.CompilerParams(dimension_semantics=("parallel",)),
    )(q, k, v, bias)


# ------------------------- span head-attention pooling -----------------------

def _head_attn_kernel(toks_ref, mask_ref, w_ref, b_ref, out_ref):
    t = toks_ref[...].astype(jnp.float32)            # (tr, W, H)
    m = mask_ref[...]                                 # (tr, W) 0/1 float
    scores = jnp.sum(t * w_ref[...], axis=-1) + b_ref[...]      # (tr, W)
    # masked_softmax: -inf fill, softmax, *mask, renormalize (+1e-13)
    sm = jnp.where(m > 0, scores, jnp.float32(-1e30))
    sm = sm - jnp.max(sm, axis=-1, keepdims=True)
    p = jnp.exp(sm)
    p = p * pl.reciprocal(jnp.sum(p, axis=-1, keepdims=True), approx=True)
    p = p * m
    p = p / (jnp.sum(p, axis=-1, keepdims=True) + 1e-13)
    out_ref[...] = jnp.sum(p[:, :, None] * t, axis=1)            # (tr, H)


def pallas_head_attention(toks, mask, w, b):
    R, W, H = toks.shape
    tr = min(128, _round_up(R, 8))
    Rp = _round_up(R, tr)
    toks_p = _pad_to(toks.astype(jnp.bfloat16), (Rp, W, H))
    mask_p = _pad_to(mask.astype(jnp.float32), (Rp, W))
    out = pl.pallas_call(
        _head_attn_kernel,
        out_shape=jax.ShapeDtypeStruct((Rp, H), jnp.float32),
        grid=(Rp // tr,),
        in_specs=[pl.BlockSpec((tr, W, H), lambda i: (i, 0, 0)),
                  pl.BlockSpec((tr, W), lambda i: (i, 0)),
                  pl.BlockSpec((1, H), lambda i: (0, 0)),
                  pl.BlockSpec((1, 1), lambda i: (0, 0))],
        out_specs=pl.BlockSpec((tr, H), lambda i: (i, 0)),
        compiler_params=pltpu.CompilerParams(dimension_semantics=("parallel",)),
    )(toks_p, mask_p, w.reshape(1, H).astype(jnp.float32),
      b.reshape(1, 1).astype(jnp.float32))
    return out[:R]


# -------------------------------- BERT encoder -------------------------------

def bert_layer(p, x, bias, n_heads):
    B, L, H = x.shape
    dh = H // n_heads
    xf = x.reshape(B * L, H)

    # fused Q/K/V projection: one (H, 3H) matmul instead of three (H, H)
    qkv = pallas_linear(xf, p['qkv']['w'], p['qkv']['b'])        # (B*L, 3H)

    def heads(y):
        return (y.reshape(B, L, n_heads, dh).transpose(0, 2, 1, 3)
                .astype(jnp.bfloat16))

    q = heads(qkv[:, :H])
    k = heads(qkv[:, H:2 * H])
    v = heads(qkv[:, 2 * H:])
    ctx = pallas_mha(q, k, v, bias, scale=1.0 / float(np.sqrt(dh)))
    ctx = ctx.transpose(0, 2, 1, 3).reshape(B * L, H)
    attn_out = pallas_linear(ctx, p['o']['w'], p['o']['b'])
    x1 = pallas_layernorm(attn_out, p['ln1_g'], p['ln1_b'], residual=xf)
    inter = pallas_linear(x1, p['i']['w'], p['i']['b'], activation='gelu')
    ffo = pallas_linear(inter, p['f']['w'], p['f']['b'])
    x2 = pallas_layernorm(ffo, p['ln2_g'], p['ln2_b'], residual=x1)
    return x2.reshape(B, L, H)


def bert_forward(p, input_ids, attn_mask, n_heads):
    B, L = input_ids.shape
    H = p['word_emb'].shape[1]
    x = (p['word_emb'][input_ids]
         + p['pos_emb'][jnp.arange(L)][None, :, :]
         + p['type_emb'][jnp.zeros((B, L), jnp.int32)])
    x = pallas_layernorm(x.reshape(B * L, H),
                         p['emb_ln_g'], p['emb_ln_b']).reshape(B, L, H)
    bias = ((1.0 - attn_mask.astype(jnp.float32)) * -10000.0)[:, None, :]
    for lyr in p['layers']:
        x = bert_layer(lyr, x, bias, n_heads)
    return x


# ----------------------------- coref head (forward) --------------------------

def embed_spans(p, h, spans, spk_ids, gen_ids, sent_map, Wmax):
    B, L, H = h.shape
    N = spans.shape[1]
    bar = jnp.arange(B)
    s = jnp.clip(spans[:, :, 0], 0, L - 1)
    e = jnp.clip(spans[:, :, 1], 0, L - 1)
    start = h[bar[:, None], s]
    end = h[bar[:, None], e]
    idx = jnp.arange(Wmax)[None, None, :]
    widths = jnp.clip(e - s + 1, 1, Wmax)
    span_idx = jnp.clip(s[:, :, None] + idx, 0, L - 1)
    mask = (idx < widths[:, :, None])
    toks = h[bar[:, None, None], span_idx]
    toks = toks.reshape(B * N, Wmax, H)
    masks = mask.reshape(B * N, Wmax).astype(jnp.float32)
    head = pallas_head_attention(toks, masks,
                                 p['head_w'], p['head_b']).reshape(B, N, H)
    widx = widths - 1
    wemb = p['width_emb'][widx]
    base = jnp.concatenate([start, end, head, wemb], axis=-1)
    spk = spk_ids[bar[:, None], s] if spk_ids is not None else jnp.zeros((B, N), jnp.int32)
    seg = (sent_map[bar[:, None], s] % 3) if sent_map is not None else jnp.zeros((B, N), jnp.int32)
    gen = (jnp.broadcast_to(gen_ids[:, None], (B, N)) if gen_ids is not None
           else jnp.zeros((B, N), jnp.int32))
    coarse = jnp.concatenate([base, p['speaker_emb'][spk],
                              p['segment_emb'][seg], p['genre_emb'][gen]], axis=-1)
    return base, coarse, widx


def bucket_distance_1d(d):
    d = np.asarray(d)
    b = np.zeros_like(d)
    b[d == 0] = 0
    b[d == 1] = 1
    b[d == 2] = 2
    b[d == 3] = 3
    b[d == 4] = 4
    b[(d >= 5) & (d <= 7)] = 5
    b[(d >= 8) & (d <= 15)] = 6
    b[(d >= 16) & (d <= 31)] = 7
    b[(d >= 32) & (d <= 63)] = 8
    b[d >= 64] = 9
    return b.astype(np.int64)


def spanbert_full_coref_forward(params, input_ids, attn_mask, spans,
                                spk_ids=None, gen_ids=None, sent_map=None):
    hp = params['hyper']
    cp_ = params['coref']
    B, L = input_ids.shape
    Wmax = hp['max_span_width']

    # --- BERT backbone ---
    h = bert_forward(params['bert'], input_ids, attn_mask, hp['n_heads'])

    # --- span embeddings ---
    base, coarse, widths = embed_spans(cp_, h, spans, spk_ids, gen_ids,
                                       sent_map, Wmax)
    _, N, M = base.shape
    CE = coarse.shape[-1]

    # --- mention / width FFNNs (fused linear+ReLU+linear(->1) kernels) ---
    ment_logits = pallas_ffnn_scalar(
        base.reshape(B * N, M), cp_['mention1_w'], cp_['mention1_b'],
        cp_['mention2_w'], cp_['mention2_b']).reshape(B, N)
    wprior = cp_['width_prior'][widths]
    width_logits = pallas_ffnn_scalar(
        wprior.reshape(B * N, 20), cp_['widthf1_w'], cp_['widthf1_b'],
        cp_['widthf2_w'], cp_['widthf2_b']).reshape(B, N)
    mention_scores = jax.nn.softmax(ment_logits + width_logits, axis=1)

    # --- coarse pair scorer, collapsed algebraically ---
    # sum((cp @ W1 + b1) @ W2 + b2, -1) = ci.v1 + cj.v2 + const  (exact math)
    w2s = jnp.sum(cp_['coarse2_w'], axis=1)                      # W2 @ 1  (M,)
    v_full = jnp.dot(cp_['coarse1_w'], w2s)                      # (2*CE,)
    const = jnp.dot(cp_['coarse1_b'], w2s) + jnp.sum(cp_['coarse2_b'])
    V = jnp.stack([v_full[:CE], v_full[CE:]], axis=1)            # (CE, 2)
    u_full = pallas_linear(coarse.reshape(B * N, CE), V,
                           jnp.zeros((2,), jnp.float32)).reshape(B, N, 2)

    # --- single batched device->host transfer for all host-side loops ---
    (ms_np, base_np, u_np, const_np, dist_tab,
     spans_np, attn_np) = jax.device_get(
        (mention_scores, base, u_full, const, cp_['dist_emb'],
         spans, attn_mask))
    const_f = float(const_np)

    # TODO(synk): greedy non-overlapping span pruning, top-k antecedents and
    # cluster building are data-dependent host loops (as in the reference);
    # no clean Pallas equivalent -> numpy on host.
    pruned = []
    for b in range(B):
        kk = max(1, int((int(attn_np[b].sum()) - 2) * hp['top_span_ratio']))
        order = np.argsort(-ms_np[b])
        used = np.zeros(L, dtype=bool)
        keep = []
        for i in order:
            s0, e0 = int(spans_np[b, i, 0]), int(spans_np[b, i, 1])
            if used[s0:e0 + 1].any():
                continue
            keep.append(int(i))
            used[s0:e0 + 1] = True
            if len(keep) == kk:
                break
        pruned.append(keep)
    maxk = max(len(x) for x in pruned)
    pt = np.stack([np.array(x + [0] * (maxk - len(x)), dtype=np.int64)
                   for x in pruned])
    bar = np.arange(B)
    spans_pruned = spans_np[bar[:, None], pt]                    # (B, maxk, 2)
    emb_pruned = base_np[bar[:, None], pt]                       # (B, maxk, M)
    u_pruned = u_np[bar[:, None], pt]                            # (B, maxk, 2)

    pairs = [(b, i, j) for b in range(B) for i in range(maxk) for j in range(i)]
    if not pairs:
        return {'mention_scores': mention_scores, 'spans_pruned': spans_pruned,
                'predicted_clusters': []}
    bi = np.array([x[0] for x in pairs])
    ii = np.array([x[1] for x in pairs])
    jj = np.array([x[2] for x in pairs])
    coarse_scores = (u_pruned[bi, ii, 0] + u_pruned[bi, jj, 1]
                     + const_f).astype(np.float32)

    k = maxk
    # mirrors the reference: coarse_mat is filled from batch-0 pair scores
    coarse_mat = np.full((k, k), -np.inf, dtype=np.float32)
    tri_i, tri_j = np.tril_indices(k, -1)
    coarse_mat[tri_i, tri_j] = (u_pruned[0, tri_i, 0] + u_pruned[0, tri_j, 1]
                                + const_f)
    c = min(hp['max_top_ant'], k)
    top_inds = np.zeros((k, c), dtype=np.int64)
    top_scores = np.zeros((k, c), dtype=np.float32)
    for i in range(k):
        order = np.argsort(-coarse_mat[i], kind='stable')[:c]
        top_inds[i] = order
        top_scores[i] = coarse_mat[i, order]

    # --- fine-grained antecedent scores (fused ant FFNN kernel on device) ---
    fine_scores = None
    if hp['fine_grained'] and c > 0:
        fine_scores = np.zeros((B, k, c), dtype=np.float32)
        feat_rows, slots = [], []
        for b in range(B):
            valid_k = len(pruned[b])
            mention_embs = emb_pruned[b, :valid_k]
            for i in range(valid_k):
                valid_c = min(i, c)
                if valid_c > 0:
                    ant_indices = top_inds[i, :valid_c]
                    ant_embs = mention_embs[ant_indices]
                    m_pos = pt[b, i]
                    ant_pos = pt[b, ant_indices]
                    distances = m_pos - ant_pos
                    dist_embs = dist_tab[bucket_distance_1d(distances)]
                    m_exp = np.repeat(mention_embs[i][None, :], valid_c, axis=0)
                    sim = m_exp * ant_embs
                    z20 = np.zeros((valid_c, 20), np.float32)
                    feat_rows.append(np.concatenate(
                        [m_exp, ant_embs, sim, dist_embs, z20, z20, z20], axis=1))
                    slots.append((b, i, valid_c))
        if feat_rows:
            # TODO(synk): build these ragged pair features on-device with
            # PrefetchScalarGridSpec + gather index_maps to remove the host
            # round trip; kept on host to mirror the reference Python loops.
            feats = jnp.asarray(np.concatenate(feat_rows, axis=0), jnp.float32)
            fsc = np.asarray(pallas_ffnn_scalar(
                feats, cp_['ant1_w'], cp_['ant1_b'],
                cp_['ant2_w'], cp_['ant2_b']))
            off = 0
            for (b, i, vc) in slots:
                fine_scores[b, i, :vc] = fsc[off:off + vc]
                off += vc

    # --- antecedent linking (host, mirrors the reference loops) ---
    predicted_antecedents, link_probs = [], []
    for b in range(B):
        b_ants, b_probs = [], []
        valid_k = len(pruned[b]) if b < len(pruned) else 0
        for i in range(k):
            if i < valid_k:
                coarse_k = top_scores[i]
                if fine_scores is not None:
                    combined = 0.5 * coarse_k + 0.5 * fine_scores[b, i]
                else:
                    combined = coarse_k
                swd = np.concatenate([[hp['dummy_bias']], combined]).astype(np.float64)
                z = swd / hp['ant_temp']
                z = z - np.max(z[np.isfinite(z)])
                ez = np.exp(z)
                probs = ez / ez.sum()
                b_probs.append(probs)
                best_idx = int(np.argmax(probs))
                best_prob = float(probs[best_idx])
                if best_idx > 0 and best_prob > hp['link_threshold']:
                    b_ants.append(int(top_inds[i, best_idx - 1]))
                else:
                    b_ants.append(-1)
            else:
                b_ants.append(-1)
        predicted_antecedents.append(b_ants)
        link_probs.append(b_probs)

    mention_to_pred, predicted_clusters = {}, []
    for b in range(B):
        if b < len(pruned):
            valid_k = len(pruned[b])
            for i in range(valid_k):
                ant_idx = predicted_antecedents[b][i]
                if ant_idx >= 0:
                    mention = tuple(int(x) for x in spans_pruned[b, i])
                    antecedent = tuple(int(x) for x in spans_pruned[b, ant_idx])
                    if antecedent in mention_to_pred:
                        cid = mention_to_pred[antecedent]
                    else:
                        cid = len(predicted_clusters)
                        mention_to_pred[antecedent] = cid
                        predicted_clusters.append([antecedent])
                    if mention not in mention_to_pred:
                        mention_to_pred[mention] = cid
                        predicted_clusters[cid].append(mention)

    return {'mention_scores': mention_scores, 'spans_pruned': spans_pruned,
            'coarse_scores': coarse_scores, 'fine_scores': fine_scores,
            'top_antecedents': top_inds[None], 'top_antecedent_scores': top_scores[None],
            'predicted_antecedents': predicted_antecedents,
            'predicted_clusters': predicted_clusters, 'link_probs': link_probs}


# --------------------------- parameter initialization ------------------------

def make_params(key, *, vocab=100, max_pos=64, H=32, n_layers=2, n_heads=2,
                inter=64, Wmax=8, ffn=64, top_span_ratio=0.4, max_top_ant=50,
                ant_temp=0.5, link_threshold=0.5, fine_grained=True):
    M = 3 * H + 20            # base span-embedding dim (2324 when H=768)
    A = 3 * M + 80            # ant_ffnn input dim     (7052 when H=768)
    CE = M + 60               # coarse span-embedding dim
    keys = iter(jax.random.split(key, 256))

    def nrm(shape, s=0.02):
        return (s * jax.random.normal(next(keys), shape)).astype(jnp.float32)

    def lin(din, dout):
        return {'w': nrm((din, dout)), 'b': jnp.zeros((dout,), jnp.float32)}

    layers = []
    for _ in range(n_layers):
        layers.append({
            'qkv': lin(H, 3 * H),          # fused Q/K/V projection
            'o': lin(H, H),
            'ln1_g': jnp.ones((H,), jnp.float32), 'ln1_b': jnp.zeros((H,), jnp.float32),
            'i': lin(H, inter), 'f': lin(inter, H),
            'ln2_g': jnp.ones((H,), jnp.float32), 'ln2_b': jnp.zeros((H,), jnp.float32),
        })
    bert = {'word_emb': nrm((vocab, H)), 'pos_emb': nrm((max_pos, H)),
            'type_emb': nrm((2, H)),
            'emb_ln_g': jnp.ones((H,), jnp.float32),
            'emb_ln_b': jnp.zeros((H,), jnp.float32),
            'layers': layers}
    coref = {
        'width_emb': nrm((Wmax, 20)), 'width_prior': nrm((Wmax, 20)),
        'speaker_emb': nrm((2, 20)), 'segment_emb': nrm((3, 20)),
        'genre_emb': nrm((7, 20)), 'dist_emb': nrm((10, 20)),
        'head_w': nrm((H,)), 'head_b': jnp.zeros((1,), jnp.float32),
        'mention1_w': nrm((M, ffn)), 'mention1_b': jnp.zeros((ffn,), jnp.float32),
        'mention2_w': nrm((ffn, 1)), 'mention2_b': jnp.zeros((1,), jnp.float32),
        'widthf1_w': nrm((20, ffn)), 'widthf1_b': jnp.zeros((ffn,), jnp.float32),
        'widthf2_w': nrm((ffn, 1)), 'widthf2_b': jnp.zeros((1,), jnp.float32),
        'coarse1_w': nrm((2 * CE, M)), 'coarse1_b': jnp.zeros((M,), jnp.float32),
        'coarse2_w': nrm((M, M)), 'coarse2_b': jnp.zeros((M,), jnp.float32),
        'ant1_w': nrm((A, ffn)), 'ant1_b': jnp.zeros((ffn,), jnp.float32),
        'ant2_w': nrm((ffn, 1)), 'ant2_b': jnp.zeros((1,), jnp.float32),
    }
    hyper = {'max_span_width': Wmax, 'n_heads': n_heads,
             'top_span_ratio': top_span_ratio, 'max_top_ant': max_top_ant,
             'ant_temp': ant_temp, 'link_threshold': link_threshold,
             'fine_grained': fine_grained, 'dummy_bias': -1.0}
    return {'bert': bert, 'coref': coref, 'hyper': hyper}


def create_spans(L, Wmax):
    out = []
    for i in range(L):
        for j in range(i, min(i + Wmax, L)):
            out.append([i, j])
    return np.array(out, dtype=np.int32)


# ------------------------------------ main -----------------------------------

if __name__ == "__main__":
    key = jax.random.PRNGKey(0)
    pkey, dkey = jax.random.split(key)
    B, L = 2, 16
    cfg = dict(vocab=100, max_pos=64, H=32, n_layers=2, n_heads=2,
               inter=64, Wmax=8, ffn=64)
    params = make_params(pkey, **cfg)

    input_ids = jax.random.randint(dkey, (B, L), 0, cfg['vocab'], dtype=jnp.int32)
    attn_np = np.ones((B, L), dtype=np.int32)
    attn_np[1, -2:] = 0                          # some padding in batch 1
    attn_mask = jnp.asarray(attn_np)
    spans_np = create_spans(L, cfg['Wmax'])      # (N, 2) enumerated spans
    spans = jnp.asarray(np.broadcast_to(spans_np[None], (B,) + spans_np.shape).copy())

    out = spanbert_full_coref_forward(params, input_ids, attn_mask, spans)
    jax.block_until_ready(out['mention_scores'])
    _ = np.asarray(out['coarse_scores'])
    print("KERNEL_OK")
</pallas_src>

<mosaic_0001>
module attributes {stable_mosaic.version = 11 : i64} {
  func.func @_ln_kernel(%arg0: i32, %arg1: memref<32x32xf32, #tpu.memory_space<vmem>>, %arg2: memref<1x32xf32, #tpu.memory_space<vmem>>, %arg3: memref<1x32xf32, #tpu.memory_space<vmem>>, %arg4: memref<32x32xf32, #tpu.memory_space<vmem>>) attributes {dimension_semantics = [#tpu.dimension_semantics<parallel>], iteration_bounds = array<i64: 1>, scalar_prefetch = 0 : i64, scratch_operands = 0 : i64, tpu.core_type = #tpu.core_type<tc>, window_params = [{transform_indices = @transform_0, window_bounds = array<i64: 32, 32>}, {pipeline_mode = #tpu.pipeline_mode<synchronous>, transform_indices = @transform_1, window_bounds = array<i64: 1, 32>}, {pipeline_mode = #tpu.pipeline_mode<synchronous>, transform_indices = @transform_2, window_bounds = array<i64: 1, 32>}, {transform_indices = @transform_3, window_bounds = array<i64: 32, 32>}]} {
    %c0 = arith.constant 0 : index
    %c0_0 = arith.constant 0 : index
    %0 = vector.load %arg1[%c0, %c0_0] : memref<32x32xf32, #tpu.memory_space<vmem>>, vector<32x32xf32>
    %cst = arith.constant dense<0.000000e+00> : vector<32xf32>
    %1 = vector.multi_reduction <add>, %0, %cst [1] : vector<32x32xf32> to vector<32xf32>
    %2 = vector.shape_cast %1 : vector<32xf32> to vector<32x1xf32>
    %cst_1 = arith.constant 3.200000e+01 : f32
    %3 = vector.broadcast %cst_1 : f32 to vector<32x1xf32>
    %4 = arith.divf %2, %3 : vector<32x1xf32>
    %5 = vector.broadcast %4 : vector<32x1xf32> to vector<32x32xf32>
    %6 = arith.subf %0, %5 : vector<32x32xf32>
    %7 = arith.mulf %6, %6 : vector<32x32xf32>
    %cst_2 = arith.constant dense<0.000000e+00> : vector<32xf32>
    %8 = vector.multi_reduction <add>, %7, %cst_2 [1] : vector<32x32xf32> to vector<32xf32>
    %9 = vector.shape_cast %8 : vector<32xf32> to vector<32x1xf32>
    %cst_3 = arith.constant 3.200000e+01 : f32
    %10 = vector.broadcast %cst_3 : f32 to vector<32x1xf32>
    %11 = arith.divf %9, %10 : vector<32x1xf32>
    %12 = vector.broadcast %4 : vector<32x1xf32> to vector<32x32xf32>
    %13 = arith.subf %0, %12 : vector<32x32xf32>
    %cst_4 = arith.constant 9.99999996E-13 : f32
    %14 = vector.broadcast %cst_4 : f32 to vector<32x1xf32>
    %15 = arith.addf %11, %14 : vector<32x1xf32>
    %16 = math.rsqrt %15 : vector<32x1xf32>
    %17 = vector.broadcast %16 : vector<32x1xf32> to vector<32x32xf32>
    %18 = arith.mulf %13, %17 : vector<32x32xf32>
    %c0_5 = arith.constant 0 : index
    %c0_6 = arith.constant 0 : index
    %19 = vector.load %arg2[%c0_5, %c0_6] : memref<1x32xf32, #tpu.memory_space<vmem>>, vector<1x32xf32>
    %20 = vector.broadcast %19 : vector<1x32xf32> to vector<32x32xf32>
    %21 = arith.mulf %18, %20 : vector<32x32xf32>
    %c0_7 = arith.constant 0 : index
    %c0_8 = arith.constant 0 : index
    %22 = vector.load %arg3[%c0_7, %c0_8] : memref<1x32xf32, #tpu.memory_space<vmem>>, vector<1x32xf32>
    %23 = vector.broadcast %22 : vector<1x32xf32> to vector<32x32xf32>
    %24 = arith.addf %21, %23 : vector<32x32xf32>
    %c0_9 = arith.constant 0 : index
    %c0_10 = arith.constant 0 : index
    %25 = vector.load %arg4[%c0_9, %c0_10] : memref<32x32xf32, #tpu.memory_space<vmem>>, vector<32x32xf32>
    tpu.vector_store %arg4[%c0_9, %c0_10], %24 {strides = array<i32>} : memref<32x32xf32, #tpu.memory_space<vmem>>, vector<32x32xf32>,
    return
  }
  func.func @transform_0(%arg0: i32) -> (i32, i32) {
    %c0_i32 = arith.constant 0 : i32
    %c0_i32_0 = arith.constant 0 : i32
    return %arg0, %c0_i32 : i32, i32
  }
  func.func @transform_1(%arg0: i32) -> (i32, i32) {
    %c0_i32 = arith.constant 0 : i32
    %c0_i32_0 = arith.constant 0 : i32
    %c0_i32_1 = arith.constant 0 : i32
    return %c0_i32, %c0_i32_0 : i32, i32
  }
  func.func @transform_2(%arg0: i32) -> (i32, i32) {
    %c0_i32 = arith.constant 0 : i32
    %c0_i32_0 = arith.constant 0 : i32
    %c0_i32_1 = arith.constant 0 : i32
    return %c0_i32, %c0_i32_0 : i32, i32
  }
  func.func @transform_3(%arg0: i32) -> (i32, i32) {
    %c0_i32 = arith.constant 0 : i32
    %c0_i32_0 = arith.constant 0 : i32
    return %arg0, %c0_i32 : i32, i32
  }
}

</mosaic_0001>

<llo_original>
// kernel: tpu_custom_call.1
$region0: #{tpu_custom_call.1}
  #allocation0 [shape = 'u32[]', space=smem, size = 0x4, offset = 0x4, fixed_abs, tag = 'smem constant byte address 0x4 - core index']
  #allocation1 [shape = 'u32[72,128]{1,0:T(1,128)}', space=vmem, size = 0x9000, scoped, tag = 'internal scratch']
  %s0 = inlined_call_operand.hbm [shape: f32[32,32], index: 0, kind: input, shape index: {}]
  %s1 = inlined_call_operand.hbm [shape: f32[1,32], index: 1, kind: input, shape index: {}]
  %s2 = inlined_call_operand.vmem [shape: f32[1,32], index: 2, kind: input, shape index: {}]
  %s3 = inlined_call_operand.hbm [shape: f32[32,32], index: 3, kind: output, shape index: {}]
  %s4 = sld [smem:[#allocation0]]
  $region30: #{tpu_custom_call.1} parent=0
    _
  %s6 = ssub.s32 1, %s4
  %s7 = scalar_select 0, %s6, %s4
  $region1: #{tpu_custom_call.1} parent=0
    #allocation2 [shape = 'u8[16384]{0}', space=vmem, size = 0x4000, scoped, tag = 'input window, operand 0, single buffered']
    #allocation3 [shape = 's32[1]{0}', space=sflag, size = 0x4, scoped, tag = 'scoped memory for tpu_custom_call.1']
    #allocation4 [shape = 's32[1]{0}', space=sflag, size = 0x4, scoped, tag = 'scoped memory for tpu_custom_call.1']
    #allocation5 [shape = 'u8[512]{0}', space=vmem, size = 0x400, scoped, tag = 'input window, operand 1, single buffered']
    #allocation6 [shape = 's32[1]{0}', space=sflag, size = 0x4, scoped, tag = 'scoped memory for tpu_custom_call.1']
    #allocation7 [shape = 'u8[16384]{0}', space=vmem, size = 0x4000, scoped, tag = 'output window, operand 0, single buffered']
    %8 = vsyncpa [#allocation3], 0
    %9 = vsyncpa [#allocation6], 0
    %10 = vsyncpa [#allocation4], 0
    // Predicated region
    $region2: #{tpu_custom_call.1} parent=1 // pred_check
      _
    $region3: #{tpu_custom_call.1} parent=1 // pred_check_branch
      %12 = sbr.rel (0) target = $region5
    $region4: #{tpu_custom_call.1} parent=1 // pred_region
      %14 = vsyncadd [#allocation3], 0
      %s15 = sshll.u32 %s0, 4
      %s16 = int_to_ptr.hbm [resolvable:$true] %s15
      %s17 = sshll.u32 [#allocation2], 4
      %s18 = int_to_ptr.vmem [resolvable:$true] %s17
      %23 = dma.hbm_to_vmem [thread:$0]  %s16, 512, %s18, [#allocation3], 128, 128, 8
    $region5: #{tpu_custom_call.1} parent=1 // pred_fallthru
      _
    // Predicated region
    $region6: #{tpu_custom_call.1} parent=1 // pred_check
      _
    $region7: #{tpu_custom_call.1} parent=1 // pred_check_branch
      %25 = sbr.rel (0) target = $region9
    $region8: #{tpu_custom_call.1} parent=1 // pred_region
      %27 = vsyncadd [#allocation6], 0
      %s29 = sshll.u32 %s1, 4
      %s30 = int_to_ptr.hbm [resolvable:$true] %s29
      %s31 = sshll.u32 [#allocation5], 4
      %s32 = int_to_ptr.vmem [resolvable:$true] %s31
      %34 = dma.hbm_to_vmem [thread:$0]  %s30, 16, %s32, [#allocation6]
    $region9: #{tpu_custom_call.1} parent=1 // pred_fallthru
      _
    // Predicated region
    $region10: #{tpu_custom_call.1} parent=1 // pred_check
      _
    $region11: #{tpu_custom_call.1} parent=1 // pred_check_branch
      %36 = sbr.rel (0) target = $region13
    $region12: #{tpu_custom_call.1} parent=1 // pred_region
      _
    $region13: #{tpu_custom_call.1} parent=1 // pred_fallthru
      _
    // Predicated region
    $region14: #{tpu_custom_call.1} parent=1 // pred_check
      _
    $region15: #{tpu_custom_call.1} parent=1 // pred_check_branch
      %38 = sbr.rel (0) target = $region17
    $region16: #{tpu_custom_call.1} parent=1 // pred_region
      %40 = dma.done [#allocation3], 512
    $region17: #{tpu_custom_call.1} parent=1 // pred_fallthru
      _
    // Predicated region
    $region18: #{tpu_custom_call.1} parent=1 // pred_check
      _
    $region19: #{tpu_custom_call.1} parent=1 // pred_check_branch
      %42 = sbr.rel (0) target = $region21
    $region20: #{tpu_custom_call.1} parent=1 // pred_region
      %44 = dma.done [#allocation6], 16
    $region21: #{tpu_custom_call.1} parent=1 // pred_fallthru
      _
    %v45 = vld [vmem:[#allocation2] sm:$0xff]
    %v46 = vld [vmem:[#allocation2 + $0x8] sm:$0xff]
    %v47 = vld [vmem:[#allocation2 + $0x10] sm:$0xff]
    %v48 = vld [vmem:[#allocation2 + $0x18] sm:$0xff]
    %vm49 = vcmask 261120
    %v50 = vsel %vm49, %v45, 0.0
    %51 = vadd.xlane.f32.xlu0 %v50
    %v52 = vpop.xlane.xlu0 %51
    %v53 = vsel %vm49, %v46, 0.0
    %54 = vadd.xlane.f32.xlu0 %v53
    %v55 = vpop.xlane.xlu0 %54
    %v56 = vsel %vm49, %v47, 0.0
    %57 = vadd.xlane.f32.xlu0 %v56
    %v58 = vpop.xlane.xlu0 %57
    %v59 = vsel %vm49, %v48, 0.0
    %60 = vadd.xlane.f32.xlu0 %v59
    %v61 = vpop.xlane.xlu0 %60
    %v62 = vrcp.pop 32.0
    %v63 = vmul.f32 32.0, %v62
    %v64 = vsub.f32 1.0, %v63
    %v65 = vmul.f32 %v62, %v64
    %v66 = vadd.f32 %v62, %v65
    %vm67 = vweird.f32 %v62
    %v68 = vsel %vm67, %v62, %v66
    %v69 = vmul.f32 %v52, %v68
    %v70 = vmul.f32 %v55, %v68
    %v71 = vmul.f32 %v58, %v68
    %v72 = vmul.f32 %v61, %v68
    %v73 = vsub.f32 %v45, %v69
    %v74 = vsub.f32 %v46, %v70
    %v75 = vsub.f32 %v47, %v71
    %v76 = vsub.f32 %v48, %v72
    %v77 = vmul.f32 %v73, %v73
    %v78 = vmul.f32 %v74, %v74
    %v79 = vmul.f32 %v75, %v75
    %v80 = vmul.f32 %v76, %v76
    %v81 = vsel %vm49, %v77, 0.0
    %82 = vadd.xlane.f32.xlu0 %v81
    %v83 = vpop.xlane.xlu0 %82
    %v84 = vsel %vm49, %v78, 0.0
    %85 = vadd.xlane.f32.xlu0 %v84
    %v86 = vpop.xlane.xlu0 %85
    %v87 = vsel %vm49, %v79, 0.0
    %88 = vadd.xlane.f32.xlu0 %v87
    %v89 = vpop.xlane.xlu0 %88
    %v90 = vsel %vm49, %v80, 0.0
    %91 = vadd.xlane.f32.xlu0 %v90
    %v92 = vpop.xlane.xlu0 %91
    %v93 = vmul.f32 %v83, %v68
    %v94 = vmul.f32 %v86, %v68
    %v95 = vmul.f32 %v89, %v68
    %v96 = vmul.f32 %v92, %v68
    %v97 = vadd.f32 %v93, 1e-12
    %v98 = vadd.f32 %v94, 1e-12
    %v99 = vadd.f32 %v95, 1e-12
    %v100 = vadd.f32 %v96, 1e-12
    %v101 = vrsqrt.pop %v97
    %v102 = vmul.f32 %v101, %v97
    %v103 = vmul.f32 %v102, %v101
    %v104 = vmul.f32 0.5, %v103
    %v105 = vsub.f32 1.5, %v104
    %v106 = vmul.f32 %v101, %v105
    %vm107 = vweird.f32 %v97
    %vm108 = vweird.f32 %v101
    %vm109 = vmor %vm107, %vm108
    %v110 = vsel %vm109, %v101, %v106
    %v111 = vrsqrt.pop %v98
    %v112 = vmul.f32 %v111, %v98
    %v113 = vmul.f32 %v112, %v111
    %v114 = vmul.f32 0.5, %v113
    %v115 = vsub.f32 1.5, %v114
    %v116 = vmul.f32 %v111, %v115
    %vm117 = vweird.f32 %v98
    %vm118 = vweird.f32 %v111
    %vm119 = vmor %vm117, %vm118
    %v120 = vsel %vm119, %v111, %v116
    %v121 = vrsqrt.pop %v99
    %v122 = vmul.f32 %v121, %v99
    %v123 = vmul.f32 %v122, %v121
    %v124 = vmul.f32 0.5, %v123
    %v125 = vsub.f32 1.5, %v124
    %v126 = vmul.f32 %v121, %v125
    %vm127 = vweird.f32 %v99
    %vm128 = vweird.f32 %v121
    %vm129 = vmor %vm127, %vm128
    %v130 = vsel %vm129, %v121, %v126
    %v131 = vrsqrt.pop %v100
    %v132 = vmul.f32 %v131, %v100
    %v133 = vmul.f32 %v132, %v131
    %v134 = vmul.f32 0.5, %v133
    %v135 = vsub.f32 1.5, %v134
    %v136 = vmul.f32 %v131, %v135
    %vm137 = vweird.f32 %v100
    %vm138 = vweird.f32 %v131
    %vm139 = vmor %vm137, %vm138
    %v140 = vsel %vm139, %v131, %v136
    %v141 = vmul.f32 %v73, %v110
    %v142 = vmul.f32 %v74, %v120
    %v143 = vmul.f32 %v75, %v130
    %v144 = vmul.f32 %v76, %v140
    %v145 = vld [vmem:[#allocation5] sm:$0x1]
    %v147 = vperm.slane %v145, 0
    %v149 = vmul.f32 %v141, %v147
    %v150 = vmul.f32 %v142, %v147
    %v151 = vmul.f32 %v143, %v147
    %v152 = vmul.f32 %v144, %v147
    %v153 = vld [vmem:[%s2] sm:$0x1]
    %v155 = vperm.slane %v153, 0
    %v157 = vadd.f32 %v149, %v155
    %v158 = vadd.f32 %v150, %v155
    %v159 = vadd.f32 %v151, %v155
    %v160 = vadd.f32 %v152, %v155
    %161 = vst.msk [vmem:[#allocation7] sm:$0xff] %vm49, %v157
    %162 = vst.msk [vmem:[#allocation7 + $0x8] sm:$0xff] %vm49, %v158
    %163 = vst.msk [vmem:[#allocation7 + $0x10] sm:$0xff] %vm49, %v159
    %164 = vst.msk [vmem:[#allocation7 + $0x18] sm:$0xff] %vm49, %v160
    // Predicated region
    $region22: #{tpu_custom_call.1} parent=1 // pred_check
      _
    $region23: #{tpu_custom_call.1} parent=1 // pred_check_branch
      %166 = sbr.rel (0) target = $region25
    $region24: #{tpu_custom_call.1} parent=1 // pred_region
      %168 = vsyncadd [#allocation4], 0
      %s169 = sshll.u32 [#allocation7], 4
      %s170 = int_to_ptr.vmem [resolvable:$true] %s169
      %s171 = sshll.u32 %s3, 4
      %s172 = int_to_ptr.hbm [resolvable:$true] %s171
      %177 = dma.vmem_to_hbm [thread:$0]  %s170, 512, %s172, [#allocation4], 128, 128, 8
    $region25: #{tpu_custom_call.1} parent=1 // pred_fallthru
      _
    // Predicated region
    $region26: #{tpu_custom_call.1} parent=1 // pred_check
      _
    $region27: #{tpu_custom_call.1} parent=1 // pred_check_branch
      %179 = sbr.rel (0) target = $region29
    $region28: #{tpu_custom_call.1} parent=1 // pred_region
      %181 = dma.done [#allocation4], 512
    $region29: #{tpu_custom_call.1} parent=1 // pred_fallthru
      _
    %182 = vsyncpa [#allocation3], 1
    %183 = vsyncpa [#allocation6], 1
    %184 = vsyncpa [#allocation4], 1

</llo_original>
